<compile_context>
chip_gen: v7x
topology: tpu7x:2x2x1
jax: 0.10.0
libtpu: 0.0.40
codegen_flags: <defaults>
</compile_context>

<pallas_src>
import functools

import jax
import jax.numpy as jnp
from jax import lax
from jax.experimental import pallas as pl
from jax.experimental.pallas import tpu as pltpu

LOG_STD_MIN = -20.0
LOG_STD_MAX = 2.0


def policy_kernel(x_ref, w1_ref, b1_ref, w2_ref, b2_ref, wh_ref, bh_ref, out_ref):
    x = x_ref[...]

    # fc1 + relu (MXU matmul, f32 accumulation; bias add / max on VPU)
    h1 = jnp.dot(x, w1_ref[...], preferred_element_type=jnp.float32) + b1_ref[...]
    h1 = jnp.maximum(h1, 0.0)

    # fc2 + relu
    h2 = jnp.dot(h1, w2_ref[...], preferred_element_type=jnp.float32) + b2_ref[...]
    h2 = jnp.maximum(h2, 0.0)

    # fused mean|log_std head: one matmul into [B, 2A]
    heads = jnp.dot(h2, wh_ref[...], preferred_element_type=jnp.float32) + bh_ref[...]

    # std half: clamp -> exp (EUP); mean half passes through untouched.
    # Lane-iota select avoids any lane slicing / concatenation.
    a = heads.shape[1] // 2
    clamped = jnp.clip(heads, LOG_STD_MIN, LOG_STD_MAX)
    expd = jnp.exp(clamped)
    lane = lax.broadcasted_iota(jnp.int32, heads.shape, dimension=1)
    out = jnp.where(lane >= a, expd, heads)

    out_ref[...] = out.astype(out_ref.dtype)


def pack_params(p):
    """Pre-concatenate the two heads once (pack time, not per call)."""
    return dict(
        w1=p["w1"], b1=p["b1"], w2=p["w2"], b2=p["b2"],
        wh=jnp.concatenate([p["wm"], p["ws"]], axis=1),   # [H, 2A]
        bh=jnp.concatenate([p["bm"], p["bs"]], axis=1),   # [1, 2A]
    )


@functools.partial(jax.jit, static_argnames=("block_b",))
def policy_forward(x, packed, *, block_b=1024):
    assert block_b % 8 == 0, "batch tile must be a multiple of 8 sublanes"
    B, F = x.shape
    A2 = packed["wh"].shape[1]
    A = A2 // 2

    weights = (packed["w1"], packed["b1"], packed["w2"], packed["b2"],
               packed["wh"], packed["bh"])

    if B <= block_b:
        # Small batch: everything fits comfortably in VMEM as whole arrays;
        # no grid, no pipeline bookkeeping.
        vmem = pl.BlockSpec(memory_space=pltpu.MemorySpace.VMEM)
        out = pl.pallas_call(
            policy_kernel,
            out_shape=jax.ShapeDtypeStruct((B, A2), jnp.float32),
            in_specs=[vmem] * (1 + len(weights)),
            out_specs=vmem,
        )(x, *weights)
    else:
        # Large batch: tile the batch (sublane) axis; pad to a block multiple
        # so every grid step sees a full tile, then slice the result back.
        n_blocks = -(-B // block_b)
        Bp = n_blocks * block_b
        xp = x if Bp == B else jnp.pad(x, ((0, Bp - B), (0, 0)))

        const = lambda arr: pl.BlockSpec(arr.shape, lambda i: (0, 0))
        out = pl.pallas_call(
            policy_kernel,
            out_shape=jax.ShapeDtypeStruct((Bp, A2), jnp.float32),
            grid=(n_blocks,),
            in_specs=[
                pl.BlockSpec((block_b, F), lambda i: (i, 0)),
                const(packed["w1"]), const(packed["b1"]),
                const(packed["w2"]), const(packed["b2"]),
                const(packed["wh"]), const(packed["bh"]),
            ],
            out_specs=pl.BlockSpec((block_b, A2), lambda i: (i, 0)),
            compiler_params=pltpu.CompilerParams(
                dimension_semantics=("parallel",)),
        )(xp, *weights)
        if Bp != B:
            out = out[:B]

    # split the lane-contiguous [B, 2A] slab in the wrapper
    return out[:, :A], out[:, A:]


def init_params(key, feature_dim, action_dim, hidden_dim):
    """Deterministic init mimicking nn.Linear default (uniform +-1/sqrt(fan_in)).
    Weights stored as [in, out] (transposed vs. PyTorch)."""
    def linear(k, fan_in, fan_out):
        kw, kb = jax.random.split(k)
        bound = 1.0 / jnp.sqrt(fan_in)
        w = jax.random.uniform(kw, (fan_in, fan_out), jnp.float32, -bound, bound)
        b = jax.random.uniform(kb, (1, fan_out), jnp.float32, -bound, bound)
        return w, b

    k1, k2, k3, k4 = jax.random.split(key, 4)
    w1, b1 = linear(k1, feature_dim, hidden_dim)
    w2, b2 = linear(k2, hidden_dim, hidden_dim)
    wm, bm = linear(k3, hidden_dim, action_dim)
    ws, bs = linear(k4, hidden_dim, action_dim)
    return dict(w1=w1, b1=b1, w2=w2, b2=b2, wm=wm, bm=bm, ws=ws, bs=bs)


def reference_forward(x, p):
    h1 = jnp.maximum(x @ p["w1"] + p["b1"], 0.0)
    h2 = jnp.maximum(h1 @ p["w2"] + p["b2"], 0.0)
    mean = h2 @ p["wm"] + p["bm"]
    log_std = jnp.clip(h2 @ p["ws"] + p["bs"], LOG_STD_MIN, LOG_STD_MAX)
    return mean, jnp.exp(log_std)


if __name__ == "__main__":
    # Small shapes consistent with the module: feature_dim=8, action_dim=4,
    # hidden_dim=32.
    feature_dim, action_dim, hidden_dim = 8, 4, 32

    key = jax.random.PRNGKey(0)
    kx1, kx2, kx3, kp = jax.random.split(key, 4)
    params = init_params(kp, feature_dim, action_dim, hidden_dim)
    packed = pack_params(params)

    # ---- path 1: tiny batch, no grid ----
    x_small = jax.random.normal(kx1, (4, feature_dim), jnp.float32)
    mean, std = policy_forward(x_small, packed)
    jax.block_until_ready((mean, std))
    mean_r, std_r = reference_forward(x_small, params)
    assert mean.shape == (4, action_dim) and std.shape == (4, action_dim)
    assert jnp.allclose(mean, mean_r, atol=1e-5), "mean mismatch (small batch)"
    assert jnp.allclose(std, std_r, atol=1e-5), "std mismatch (small batch)"
    assert bool(jnp.all(std > 0.0)), "std must be positive"

    # ---- path 2: batched RL workload, 1-D parallel grid over the batch ----
    x_big = jax.random.normal(kx2, (64, feature_dim), jnp.float32)
    mean_b, std_b = policy_forward(x_big, packed, block_b=16)
    jax.block_until_ready((mean_b, std_b))
    mean_br, std_br = reference_forward(x_big, params)
    assert mean_b.shape == (64, action_dim) and std_b.shape == (64, action_dim)
    assert jnp.allclose(mean_b, mean_br, atol=1e-5), "mean mismatch (gridded)"
    assert jnp.allclose(std_b, std_br, atol=1e-5), "std mismatch (gridded)"
    assert bool(jnp.all(std_b > 0.0)), "std must be positive (gridded)"

    # ---- path 3: non-divisible batch, gridded path with zero-pad + slice ----
    x_odd = jax.random.normal(kx3, (50, feature_dim), jnp.float32)
    mean_o, std_o = policy_forward(x_odd, packed, block_b=16)
    jax.block_until_ready((mean_o, std_o))
    mean_or, std_or = reference_forward(x_odd, params)
    assert mean_o.shape == (50, action_dim) and std_o.shape == (50, action_dim)
    assert jnp.allclose(mean_o, mean_or, atol=1e-5), "mean mismatch (padded)"
    assert jnp.allclose(std_o, std_or, atol=1e-5), "std mismatch (padded)"

    # TODO(synk): PolicyNetwork.sample (Normal.rsample / tanh / log_prob) is a
    # separate method, not part of forward(); could be fused with pltpu.prng_*
    # if ever needed.
    print("KERNEL_OK")
</pallas_src>

<mosaic_0001>
module attributes {stable_mosaic.version = 11 : i64} {
  func.func @policy_kernel(%arg0: memref<4x8xf32, #tpu.memory_space<vmem>>, %arg1: memref<8x32xf32, #tpu.memory_space<vmem>>, %arg2: memref<1x32xf32, #tpu.memory_space<vmem>>, %arg3: memref<32x32xf32, #tpu.memory_space<vmem>>, %arg4: memref<1x32xf32, #tpu.memory_space<vmem>>, %arg5: memref<32x8xf32, #tpu.memory_space<vmem>>, %arg6: memref<1x8xf32, #tpu.memory_space<vmem>>, %arg7: memref<4x8xf32, #tpu.memory_space<vmem>>) attributes {dimension_semantics = [], scalar_prefetch = 0 : i64, scratch_operands = 0 : i64, tpu.core_type = #tpu.core_type<tc>} {
    %c0 = arith.constant 0 : index
    %c0_0 = arith.constant 0 : index
    %0 = vector.load %arg0[%c0, %c0_0] : memref<4x8xf32, #tpu.memory_space<vmem>>, vector<4x8xf32>
    %c0_1 = arith.constant 0 : index
    %c0_2 = arith.constant 0 : index
    %1 = vector.load %arg1[%c0_1, %c0_2] : memref<8x32xf32, #tpu.memory_space<vmem>>, vector<8x32xf32>
    %cst = arith.constant dense<0.000000e+00> : vector<4x32xf32>
    %2 = tpu.matmul %0, %1, %cst {dimension_numbers = #tpu.dot_dimension_numbers<[1], [0], [0], [1], [0, 0, 1, 1], [], []>} : vector<4x8xf32>, vector<8x32xf32>, vector<4x32xf32> -> vector<4x32xf32>
    %c0_3 = arith.constant 0 : index
    %c0_4 = arith.constant 0 : index
    %3 = vector.load %arg2[%c0_3, %c0_4] : memref<1x32xf32, #tpu.memory_space<vmem>>, vector<1x32xf32>
    %4 = vector.broadcast %3 : vector<1x32xf32> to vector<4x32xf32>
    %5 = arith.addf %2, %4 : vector<4x32xf32>
    %cst_5 = arith.constant 0.000000e+00 : f32
    %6 = vector.broadcast %cst_5 : f32 to vector<4x32xf32>
    %7 = arith.maximumf %5, %6 : vector<4x32xf32>
    %c0_6 = arith.constant 0 : index
    %c0_7 = arith.constant 0 : index
    %8 = vector.load %arg3[%c0_6, %c0_7] : memref<32x32xf32, #tpu.memory_space<vmem>>, vector<32x32xf32>
    %cst_8 = arith.constant dense<0.000000e+00> : vector<4x32xf32>
    %9 = tpu.matmul %7, %8, %cst_8 {dimension_numbers = #tpu.dot_dimension_numbers<[1], [0], [0], [1], [0, 0, 1, 1], [], []>} : vector<4x32xf32>, vector<32x32xf32>, vector<4x32xf32> -> vector<4x32xf32>
    %c0_9 = arith.constant 0 : index
    %c0_10 = arith.constant 0 : index
    %10 = vector.load %arg4[%c0_9, %c0_10] : memref<1x32xf32, #tpu.memory_space<vmem>>, vector<1x32xf32>
    %11 = vector.broadcast %10 : vector<1x32xf32> to vector<4x32xf32>
    %12 = arith.addf %9, %11 : vector<4x32xf32>
    %cst_11 = arith.constant 0.000000e+00 : f32
    %13 = vector.broadcast %cst_11 : f32 to vector<4x32xf32>
    %14 = arith.maximumf %12, %13 : vector<4x32xf32>
    %c0_12 = arith.constant 0 : index
    %c0_13 = arith.constant 0 : index
    %15 = vector.load %arg5[%c0_12, %c0_13] : memref<32x8xf32, #tpu.memory_space<vmem>>, vector<32x8xf32>
    %cst_14 = arith.constant dense<0.000000e+00> : vector<4x8xf32>
    %16 = tpu.matmul %14, %15, %cst_14 {dimension_numbers = #tpu.dot_dimension_numbers<[1], [0], [0], [1], [0, 0, 1, 1], [], []>} : vector<4x32xf32>, vector<32x8xf32>, vector<4x8xf32> -> vector<4x8xf32>
    %c0_15 = arith.constant 0 : index
    %c0_16 = arith.constant 0 : index
    %17 = vector.load %arg6[%c0_15, %c0_16] : memref<1x8xf32, #tpu.memory_space<vmem>>, vector<1x8xf32>
    %18 = vector.broadcast %17 : vector<1x8xf32> to vector<4x8xf32>
    %19 = arith.addf %16, %18 : vector<4x8xf32>
    %cst_17 = arith.constant -2.000000e+01 : f32
    %cst_18 = arith.constant 2.000000e+00 : f32
    %20 = vector.broadcast %cst_17 : f32 to vector<4x8xf32>
    %21 = arith.maximumf %20, %19 : vector<4x8xf32>
    %22 = vector.broadcast %cst_18 : f32 to vector<4x8xf32>
    %23 = arith.minimumf %22, %21 : vector<4x8xf32>
    %24 = math.exp %23 : vector<4x8xf32>
    %25 = tpu.iota {dimensions = array<i32: 1>} : vector<4x8xi32>
    %c4_i32 = arith.constant 4 : i32
    %26 = vector.broadcast %c4_i32 : i32 to vector<4x8xi32>
    %27 = arith.cmpi sge, %25, %26 : vector<4x8xi32>
    %28 = arith.select %27, %24, %19 : vector<4x8xi1>, vector<4x8xf32>
    %c0_19 = arith.constant 0 : index
    %c0_20 = arith.constant 0 : index
    %29 = vector.load %arg7[%c0_19, %c0_20] : memref<4x8xf32, #tpu.memory_space<vmem>>, vector<4x8xf32>
    tpu.vector_store %arg7[%c0_19, %c0_20], %28 {strides = array<i32>} : memref<4x8xf32, #tpu.memory_space<vmem>>, vector<4x8xf32>,
    return
  }
}

</mosaic_0001>

<llo_original>
// kernel: policy_forward.1
$region0: #{policy_forward.1}
  #allocation0 [shape = 'u32[]', space=smem, size = 0x4, offset = 0x4, fixed_abs, tag = 'smem constant byte address 0x4 - core index']
  #allocation1 [shape = 'u32[144,128]{1,0:T(1,128)}', space=vmem, size = 0x12000, scoped, tag = 'internal scratch']
  %s0 = inlined_call_operand.vmem [shape: f32[4,8], index: 0, kind: input, shape index: {}]
  %s1 = inlined_call_operand.vmem [shape: f32[8,32], index: 1, kind: input, shape index: {}]
  %s2 = inlined_call_operand.vmem [shape: f32[1,32], index: 2, kind: input, shape index: {}]
  %s3 = inlined_call_operand.vmem [shape: f32[32,32], index: 3, kind: input, shape index: {}]
  %s4 = inlined_call_operand.vmem [shape: f32[1,32], index: 4, kind: input, shape index: {}]
  %s5 = inlined_call_operand.vmem [shape: f32[32,8], index: 5, kind: input, shape index: {}]
  %s6 = inlined_call_operand.vmem [shape: f32[1,8], index: 6, kind: input, shape index: {}]
  %s7 = inlined_call_operand.vmem [shape: f32[4,8], index: 7, kind: output, shape index: {}]
  %s8 = sld [smem:[#allocation0]]
  $region38: #{policy_forward.1} parent=0
    _
  %s10 = ssub.s32 1, %s8
  %s11 = scalar_select 0, %s10, %s8
  // Predicated region
  $region2: #{policy_forward.1} parent=0 // pred_check
    _
  $region3: #{policy_forward.1} parent=0 // pred_check_branch
    %13 = sbr.rel (0) target = $region5
  $region4: #{policy_forward.1} parent=0 // pred_region
    _
  $region5: #{policy_forward.1} parent=0 // pred_fallthru
    _
  // Predicated region
  $region6: #{policy_forward.1} parent=0 // pred_check
    _
  $region7: #{policy_forward.1} parent=0 // pred_check_branch
    %15 = sbr.rel (0) target = $region9
  $region8: #{policy_forward.1} parent=0 // pred_region
    _
  $region9: #{policy_forward.1} parent=0 // pred_fallthru
    _
  // Predicated region
  $region10: #{policy_forward.1} parent=0 // pred_check
    _
  $region11: #{policy_forward.1} parent=0 // pred_check_branch
    %17 = sbr.rel (0) target = $region13
  $region12: #{policy_forward.1} parent=0 // pred_region
    _
  $region13: #{policy_forward.1} parent=0 // pred_fallthru
    _
  // Predicated region
  $region14: #{policy_forward.1} parent=0 // pred_check
    _
  $region15: #{policy_forward.1} parent=0 // pred_check_branch
    %19 = sbr.rel (0) target = $region17
  $region16: #{policy_forward.1} parent=0 // pred_region
    _
  $region17: #{policy_forward.1} parent=0 // pred_fallthru
    _
  // Predicated region
  $region18: #{policy_forward.1} parent=0 // pred_check
    _
  $region19: #{policy_forward.1} parent=0 // pred_check_branch
    %21 = sbr.rel (0) target = $region21
  $region20: #{policy_forward.1} parent=0 // pred_region
    _
  $region21: #{policy_forward.1} parent=0 // pred_fallthru
    _
  // Predicated region
  $region22: #{policy_forward.1} parent=0 // pred_check
    _
  $region23: #{policy_forward.1} parent=0 // pred_check_branch
    %23 = sbr.rel (0) target = $region25
  $region24: #{policy_forward.1} parent=0 // pred_region
    _
  $region25: #{policy_forward.1} parent=0 // pred_fallthru
    _
  // Predicated region
  $region26: #{policy_forward.1} parent=0 // pred_check
    _
  $region27: #{policy_forward.1} parent=0 // pred_check_branch
    %25 = sbr.rel (0) target = $region29
  $region28: #{policy_forward.1} parent=0 // pred_region
    _
  $region29: #{policy_forward.1} parent=0 // pred_fallthru
    _
  %v26 = vld [vmem:[%s0] sm:$0xf]
  %v27 = vld [vmem:[%s1] sm:$0xff]
  %v28 = vld [vmem:[%s2] sm:$0x1]
  %v30 = vlaneseq
  %v31 = vshrl.u32 %v30, 7
  %v32 = vsub.s32 0, %v31
  %v33 = vrot.slane %v28, %v32
  %vm35 = vcmask 64512
  %v37 = vsel %vm35, %v26, 0
  %39 = vmatprep.subr.mxu0 0.0
  %40 = vmatpush1.msra.mxu0 %v27
  %41 = vmatprep.subr.mxu0 0.0
  %42 = vmatpush1.msra.mxu0 0.0
  %43 = vmatprep.subr.mxu0 0.0
  %44 = vmatpush1.msra.mxu0 0.0
  %45 = vmatprep.subr.mxu0 0.0
  %46 = vmatpush1.msra.mxu0 0.0
  %47 = vmatprep.subr.mxu0 0.0
  %48 = vmatpush1.msra.mxu0 0.0
  %49 = vmatprep.subr.mxu0 0.0
  %50 = vmatpush1.msra.mxu0 0.0
  %51 = vmatprep.subr.mxu0 0.0
  %52 = vmatpush1.msra.mxu0 0.0
  %53 = vmatprep.subr.mxu0 0.0
  %54 = vmatpush1.msra.mxu0 0.0
  %55 = vmatprep.subr.mxu0 0.0
  %56 = vmatpush1.msra.mxu0 0.0
  %57 = vmatprep.subr.mxu0 0.0
  %58 = vmatpush1.msra.mxu0 0.0
  %59 = vmatprep.subr.mxu0 0.0
  %60 = vmatpush1.msra.mxu0 0.0
  %61 = vmatprep.subr.mxu0 0.0
  %62 = vmatpush1.msra.mxu0 0.0
  %63 = vmatprep.subr.mxu0 0.0
  %64 = vmatpush1.msra.mxu0 0.0
  %65 = vmatprep.subr.mxu0 0.0
  %66 = vmatpush1.msra.mxu0 0.0
  %67 = vmatprep.subr.mxu0 0.0
  %68 = vmatpush1.msra.mxu0 0.0
  %69 = vmatprep.subr.mxu0 0.0
  %70 = vmatpush1.msra.mxu0 0.0
  %71 = vmatprep.subr.mxu0 0.0
  %72 = vmatpush1.msra.mxu0 0.0
  %73 = vmatprep.subr.mxu0 0.0
  %74 = vmatpush1.msra.mxu0 0.0
  %75 = vmatprep.subr.mxu0 0.0
  %76 = vmatpush1.msra.mxu0 0.0
  %77 = vmatprep.subr.mxu0 0.0
  %78 = vmatpush1.msra.mxu0 0.0
  %79 = vmatprep.subr.mxu0 0.0
  %80 = vmatpush1.msra.mxu0 0.0
  %81 = vmatprep.subr.mxu0 0.0
  %82 = vmatpush1.msra.mxu0 0.0
  %83 = vmatprep.subr.mxu0 0.0
  %84 = vmatpush1.msra.mxu0 0.0
  %85 = vmatprep.subr.mxu0 0.0
  %86 = vmatpush1.msra.mxu0 0.0
  %87 = vmatprep.subr.mxu0 0.0
  %88 = vmatpush1.msra.mxu0 0.0
  %89 = vmatprep.subr.mxu0 0.0
  %90 = vmatpush1.msra.mxu0 0.0
  %91 = vmatprep.subr.mxu0 0.0
  %92 = vmatpush1.msra.mxu0 0.0
  %93 = vmatprep.subr.mxu0 0.0
  %94 = vmatpush1.msra.mxu0 0.0
  %95 = vmatprep.subr.mxu0 0.0
  %96 = vmatpush1.msra.mxu0 0.0
  %97 = vmatprep.subr.mxu0 0.0
  %98 = vmatpush1.msra.mxu0 0.0
  %99 = vmatprep.subr.mxu0 0.0
  %100 = vmatpush1.msra.mxu0 0.0
  %101 = vmatprep.subr.mxu0 0.0
  %102 = vmatpush1.msra.mxu0 0.0
  %103 = vmatprep.mubr.f32.mxu0 0.0
  %104 = vmatmul.mubr.f32.gmra.mrb[0].mxu0 %v37
  %v105 = vpop.f32.mrb[0].mxu0
  %v106 = vadd.f32 %v33, %v105
  %v107 = vpop.f32.mrb[0].mxu0
  %108 = vdwg.mxu0
  %v109 = vmax.f32 %v106, 0.0
  %v110 = vld [vmem:[%s3] sm:$0xff]
  %v111 = vld [vmem:[%s3 + $0x8] sm:$0xff]
  %v112 = vld [vmem:[%s3 + $0x10] sm:$0xff]
  %v113 = vld [vmem:[%s3 + $0x18] sm:$0xff]
  %v114 = vld [vmem:[%s4] sm:$0x1]
  %v116 = vlaneseq
  %v117 = vshrl.u32 %v116, 7
  %v118 = vsub.s32 0, %v117
  %v119 = vrot.slane %v114, %v118
  %vm121 = vcmask 261120
  %v123 = vsel %vm121, %v109, 0
  %125 = vmatprep.subr.mxu0 0.0
  %126 = vmatpush1.msra.mxu0 %v110
  %127 = vmatprep.subr.mxu0 0.0
  %128 = vmatpush1.msra.mxu0 %v111
  %129 = vmatprep.subr.mxu0 0.0
  %130 = vmatpush1.msra.mxu0 %v112
  %131 = vmatprep.subr.mxu0 0.0
  %132 = vmatpush1.msra.mxu0 %v113
  %133 = vmatprep.subr.mxu0 0.0
  %134 = vmatpush1.msra.mxu0 0.0
  %135 = vmatprep.subr.mxu0 0.0
  %136 = vmatpush1.msra.mxu0 0.0
  %137 = vmatprep.subr.mxu0 0.0
  %138 = vmatpush1.msra.mxu0 0.0
  %139 = vmatprep.subr.mxu0 0.0
  %140 = vmatpush1.msra.mxu0 0.0
  %141 = vmatprep.subr.mxu0 0.0
  %142 = vmatpush1.msra.mxu0 0.0
  %143 = vmatprep.subr.mxu0 0.0
  %144 = vmatpush1.msra.mxu0 0.0
  %145 = vmatprep.subr.mxu0 0.0
  %146 = vmatpush1.msra.mxu0 0.0
  %147 = vmatprep.subr.mxu0 0.0
  %148 = vmatpush1.msra.mxu0 0.0
  %149 = vmatprep.subr.mxu0 0.0
  %150 = vmatpush1.msra.mxu0 0.0
  %151 = vmatprep.subr.mxu0 0.0
  %152 = vmatpush1.msra.mxu0 0.0
  %153 = vmatprep.subr.mxu0 0.0
  %154 = vmatpush1.msra.mxu0 0.0
  %155 = vmatprep.subr.mxu0 0.0
  %156 = vmatpush1.msra.mxu0 0.0
  %157 = vmatprep.subr.mxu0 0.0
  %158 = vmatpush1.msra.mxu0 0.0
  %159 = vmatprep.subr.mxu0 0.0
  %160 = vmatpush1.msra.mxu0 0.0
  %161 = vmatprep.subr.mxu0 0.0
  %162 = vmatpush1.msra.mxu0 0.0
  %163 = vmatprep.subr.mxu0 0.0
  %164 = vmatpush1.msra.mxu0 0.0
  %165 = vmatprep.subr.mxu0 0.0
  %166 = vmatpush1.msra.mxu0 0.0
  %167 = vmatprep.subr.mxu0 0.0
  %168 = vmatpush1.msra.mxu0 0.0
  %169 = vmatprep.subr.mxu0 0.0
  %170 = vmatpush1.msra.mxu0 0.0
  %171 = vmatprep.subr.mxu0 0.0
  %172 = vmatpush1.msra.mxu0 0.0
  %173 = vmatprep.subr.mxu0 0.0
  %174 = vmatpush1.msra.mxu0 0.0
  %175 = vmatprep.subr.mxu0 0.0
  %176 = vmatpush1.msra.mxu0 0.0
  %177 = vmatprep.subr.mxu0 0.0
  %178 = vmatpush1.msra.mxu0 0.0
  %179 = vmatprep.subr.mxu0 0.0
  %180 = vmatpush1.msra.mxu0 0.0
  %181 = vmatprep.subr.mxu0 0.0
  %182 = vmatpush1.msra.mxu0 0.0
  %183 = vmatprep.subr.mxu0 0.0
  %184 = vmatpush1.msra.mxu0 0.0
  %185 = vmatprep.subr.mxu0 0.0
  %186 = vmatpush1.msra.mxu0 0.0
  %187 = vmatprep.subr.mxu0 0.0
  %188 = vmatpush1.msra.mxu0 0.0
  %189 = vmatprep.mubr.f32.mxu0 0.0
  %190 = vmatmul.mubr.f32.gmra.mrb[0].mxu0 %v123
  %v191 = vpop.f32.mrb[0].mxu0
  %v192 = vadd.f32 %v119, %v191
  %v193 = vpop.f32.mrb[0].mxu0
  %194 = vdwg.mxu0
  %v195 = vmax.f32 %v192, 0.0
  %v196 = vld [vmem:[%s5] sm:$0xff]
  %v197 = vld [vmem:[%s5 + $0x8] sm:$0xff]
  %v198 = vld [vmem:[%s5 + $0x10] sm:$0xff]
  %v199 = vld [vmem:[%s5 + $0x18] sm:$0xff]
  %v200 = vld [vmem:[%s6] sm:$0x1]
  %v202 = vlaneseq
  %v203 = vshrl.u32 %v202, 7
  %v204 = vsub.s32 0, %v203
  %v205 = vrot.slane %v200, %v204
  %v208 = vsel %vm121, %v195, 0
  %210 = vmatprep.subr.mxu0 0.0
  %211 = vmatpush1.msra.mxu0 %v196
  %212 = vmatprep.subr.mxu0 0.0
  %213 = vmatpush1.msra.mxu0 %v197
  %214 = vmatprep.subr.mxu0 0.0
  %215 = vmatpush1.msra.mxu0 %v198
  %216 = vmatprep.subr.mxu0 0.0
  %217 = vmatpush1.msra.mxu0 %v199
  %218 = vmatprep.subr.mxu0 0.0
  %219 = vmatpush1.msra.mxu0 0.0
  %220 = vmatprep.subr.mxu0 0.0
  %221 = vmatpush1.msra.mxu0 0.0
  %222 = vmatprep.subr.mxu0 0.0
  %223 = vmatpush1.msra.mxu0 0.0
  %224 = vmatprep.subr.mxu0 0.0
  %225 = vmatpush1.msra.mxu0 0.0
  %226 = vmatprep.subr.mxu0 0.0
  %227 = vmatpush1.msra.mxu0 0.0
  %228 = vmatprep.subr.mxu0 0.0
  %229 = vmatpush1.msra.mxu0 0.0
  %230 = vmatprep.subr.mxu0 0.0
  %231 = vmatpush1.msra.mxu0 0.0
  %232 = vmatprep.subr.mxu0 0.0
  %233 = vmatpush1.msra.mxu0 0.0
  %234 = vmatprep.subr.mxu0 0.0
  %235 = vmatpush1.msra.mxu0 0.0
  %236 = vmatprep.subr.mxu0 0.0
  %237 = vmatpush1.msra.mxu0 0.0
  %238 = vmatprep.subr.mxu0 0.0
  %239 = vmatpush1.msra.mxu0 0.0
  %240 = vmatprep.subr.mxu0 0.0
  %241 = vmatpush1.msra.mxu0 0.0
  %242 = vmatprep.subr.mxu0 0.0
  %243 = vmatpush1.msra.mxu0 0.0
  %244 = vmatprep.subr.mxu0 0.0
  %245 = vmatpush1.msra.mxu0 0.0
  %246 = vmatprep.subr.mxu0 0.0
  %247 = vmatpush1.msra.mxu0 0.0
  %248 = vmatprep.subr.mxu0 0.0
  %249 = vmatpush1.msra.mxu0 0.0
  %250 = vmatprep.subr.mxu0 0.0
  %251 = vmatpush1.msra.mxu0 0.0
  %252 = vmatprep.subr.mxu0 0.0
  %253 = vmatpush1.msra.mxu0 0.0
  %254 = vmatprep.subr.mxu0 0.0
  %255 = vmatpush1.msra.mxu0 0.0
  %256 = vmatprep.subr.mxu0 0.0
  %257 = vmatpush1.msra.mxu0 0.0
  %258 = vmatprep.subr.mxu0 0.0
  %259 = vmatpush1.msra.mxu0 0.0
  %260 = vmatprep.subr.mxu0 0.0
  %261 = vmatpush1.msra.mxu0 0.0
  %262 = vmatprep.subr.mxu0 0.0
  %263 = vmatpush1.msra.mxu0 0.0
  %264 = vmatprep.subr.mxu0 0.0
  %265 = vmatpush1.msra.mxu0 0.0
  %266 = vmatprep.subr.mxu0 0.0
  %267 = vmatpush1.msra.mxu0 0.0
  %268 = vmatprep.subr.mxu0 0.0
  %269 = vmatpush1.msra.mxu0 0.0
  %270 = vmatprep.subr.mxu0 0.0
  %271 = vmatpush1.msra.mxu0 0.0
  %272 = vmatprep.subr.mxu0 0.0
  %273 = vmatpush1.msra.mxu0 0.0
  %274 = vmatprep.mubr.f32.mxu0 0.0
  %275 = vmatmul.mubr.f32.gmra.mrb[0].mxu0 %v208
  %v276 = vpop.f32.mrb[0].mxu0
  %v277 = vadd.f32 %v205, %v276
  %v278 = vpop.f32.mrb[0].mxu0
  %279 = vdwg.mxu0
  %v280 = vmax.f32 %v277, -20.0
  %v281 = vmin.f32 %v280, 2.0
  %v282 = vmul.f32 %v281, 1.442695
  %v283 = vpow.pop %v282
  %v284 = vlaneseq
  %v285 = vand.u32 %v284, 127
  %vm286 = vcmp.ge.s32.totalorder %v285, 4
  %v287 = vsel %vm286, %v283, %v277
  %vm288 = vcmask 60416
  %289 = vst.msk [vmem:[%s7] sm:$0xf] %vm288, %v287
  // Predicated region
  $region30: #{policy_forward.1} parent=0 // pred_check
    _
  $region31: #{policy_forward.1} parent=0 // pred_check_branch
    %291 = sbr.rel (0) target = $region33
  $region32: #{policy_forward.1} parent=0 // pred_region
    _
  $region33: #{policy_forward.1} parent=0 // pred_fallthru
    _
  // Predicated region
  $region34: #{policy_forward.1} parent=0 // pred_check
    _
  $region35: #{policy_forward.1} parent=0 // pred_check_branch
    %293 = sbr.rel (0) target = $region37
  $region36: #{policy_forward.1} parent=0 // pred_region
    _
  $region37: #{policy_forward.1} parent=0 // pred_fallthru
    _

</llo_original>
